<compile_context>
chip_gen: v7x
topology: tpu7x:2x2x1
jax: 0.10.0
libtpu: 0.0.40
codegen_flags: <defaults>
</compile_context>

<pallas_src>
import jax
import jax.numpy as jnp
from jax.experimental import pallas as pl
from jax.experimental.pallas import tpu as pltpu

LANE_PAD = 128  # in-kernel compute width of the label axis (lane-dense)


def _make_head_kernel(n_labels):
    """Fused classifier head: logits -> softmax probs + masked per-token NLL."""

    def kernel(x_ref, w_ref, b_ref, albl_ref, probs_ref, nll_ref):
        # x_ref:     [TN, H]        bf16  token tile of the last hidden state
        # w_ref:     [H, 128]       bf16  classifier weight, lane-padded (resident)
        # b_ref:     [1, 128]       f32   bias; padded columns hold -1e30
        # albl_ref:  [TN, 1]        i32   label if attention_mask==1 else -1
        # probs_ref: [TN, n_labels] f32   softmax probabilities (narrow writeback)
        # nll_ref:   [TN, 1]        f32   per-token NLL, 0 for ignored tokens
        x = x_ref[...]
        w = w_ref[...]

        # Linear(hidden_size, n_labels): bf16 MXU, f32 accumulation.  Padded
        # label columns pick up -1e30 from the bias -> exp() underflows to 0,
        # so they contribute nothing to the softmax sum or the CE pick.
        logits = jnp.dot(x, w, preferred_element_type=jnp.float32) + b_ref[...]

        # softmax over the label axis (F.softmax(logits, -1))
        m = jnp.max(logits, axis=-1, keepdims=True)               # [TN, 1]
        e = jnp.exp(logits - m)                                   # [TN, 128]
        s = jnp.sum(e, axis=-1, keepdims=True)                    # [TN, 1]
        probs = e * pl.reciprocal(s, approx=False)                # [TN, 128]
        probs_ref[...] = probs[:, :n_labels]                      # narrow store

        # cross-entropy with ignore_index semantics:
        #   tok_nll = log_z - logits[label]; ignored tokens contribute 0.
        log_z = m + jnp.log(s)                                    # [TN, 1]
        albl = albl_ref[...]                                      # [TN, 1]
        n_tok, n_lane = logits.shape
        class_ids = jax.lax.broadcasted_iota(jnp.int32, (n_tok, n_lane), 1)
        onehot = (class_ids == albl).astype(jnp.float32)          # [TN, 128]
        picked = jnp.sum(onehot * logits, axis=-1, keepdims=True)
        tok_nll = log_z - picked                                  # [TN, 1]
        # NaN-safe gating with where (not multiply).  Rows past N in the last
        # grid tile compute garbage but their output writes are dropped.
        nll_ref[...] = jnp.where(albl >= 0, tok_nll, 0.0)

    return kernel


def _choose_token_tile(n_tokens, hidden):
    """Token tile sized for a ~24 MiB double-buffered streaming footprint.

    Dominant per-row cost: 2 (double-buffer) x H bf16 for the x stream plus
    ~2 KiB of f32 intermediates at the 128-lane compute width.  With
    vmem_limit_bytes = 48 MiB this fits every generation (v7x: 64 MiB / TC
    physical; v5e / v6e: 128 MiB physical) while amortizing the ~0.35 us
    per-grid-step pipeline overhead.
    """
    if n_tokens <= 16:
        return n_tokens                       # single full-extent block (legal)
    budget = 24 * 1024 * 1024
    per_row = 2 * 2 * hidden + 2048
    tn = budget // per_row
    tn = max(16, min(4096, tn))
    tn = (tn // 16) * 16                      # bf16 native tile is (16, 128)
    return min(tn, (n_tokens // 16) * 16)


def protein_embed_forward(input_ids, attention_mask, labels, params):
    """Reproduces ProteinEmbed.forward(input_ids, attention_mask, labels=labels).

    Returns (loss, probs), matching the PyTorch `(loss, outputs)` tuple.
    """
    # ---- frozen base model (synthetic glue): last hidden state lookup ------
    emb_table = params["embedding"]                  # stored bf16: gather emits bf16
    sequence_output = emb_table[input_ids]           # [B, S, H]
    # dropout (p=0.2) is identity in eval mode.

    B, S, H = sequence_output.shape
    n_labels = params["cls_b"].shape[0]
    N = B * S

    x = sequence_output.reshape(N, H)                # no pad, no extra HBM pass
    if x.dtype != jnp.bfloat16:
        x = x.astype(jnp.bfloat16)

    TN = _choose_token_tile(N, H)
    n_tiles = pl.cdiv(N, TN)

    # W lane-padded to 128 so softmax/CE run full-lane in-kernel; padded bias
    # columns hold -1e30 so those logits never win the max and exp() -> 0.
    w = params["cls_w"].T.astype(jnp.bfloat16)                      # [H, L]
    w = jnp.pad(w, ((0, 0), (0, LANE_PAD - n_labels)))              # [H, 128]
    b = jnp.full((1, LANE_PAD), -1e30, dtype=jnp.float32)
    b = b.at[0, :n_labels].set(params["cls_b"].astype(jnp.float32))

    # Fuse labels + attention_mask into one int32 stream: -1 == ignore.
    active_label = jnp.where(attention_mask.reshape(N) == 1,
                             labels.reshape(N), -1).astype(jnp.int32)
    active_label = active_label.reshape(N, 1)

    kernel = _make_head_kernel(n_labels)

    probs_flat, nll = pl.pallas_call(
        kernel,
        grid=(n_tiles,),
        out_shape=(
            jax.ShapeDtypeStruct((N, n_labels), jnp.float32),   # narrow probs
            jax.ShapeDtypeStruct((N, 1), jnp.float32),          # masked per-token NLL
        ),
        in_specs=[
            pl.BlockSpec((TN, H), lambda i: (i, 0)),            # x tile (streamed)
            pl.BlockSpec((H, LANE_PAD), lambda i: (0, 0)),      # W (resident)
            pl.BlockSpec((1, LANE_PAD), lambda i: (0, 0)),      # b (resident)
            pl.BlockSpec((TN, 1), lambda i: (i, 0)),            # active_label
        ],
        out_specs=(
            pl.BlockSpec((TN, n_labels), lambda i: (i, 0)),
            pl.BlockSpec((TN, 1), lambda i: (i, 0)),
        ),
        compiler_params=pltpu.CompilerParams(
            dimension_semantics=("parallel",),          # megacore-shardable
            vmem_limit_bytes=48 * 1024 * 1024),
    )(x, w, b, active_label)

    probs = probs_flat.reshape(B, S, n_labels)

    # CrossEntropyLoss(reduction='mean') over non-ignored tokens.  NaN when no
    # token is active (0 / 0), same as PyTorch.
    count = jnp.sum((attention_mask.reshape(-1) == 1).astype(jnp.float32))
    loss = jnp.sum(nll) / count
    return loss, probs


if __name__ == "__main__":
    # Small shapes consistent with the module: batch=2, seq=8, hidden=32,
    # vocab=25 (protein alphabet-ish), n_labels=2.
    B, S, H, V, L = 2, 8, 32, 25, 2

    key = jax.random.PRNGKey(0)
    k_emb, k_w, k_ids, k_lbl = jax.random.split(key, 4)

    params = {
        # synthetic frozen base: bf16 embedding table standing in for hidden_states[-1]
        "embedding": (jax.random.normal(k_emb, (V, H), dtype=jnp.float32)
                      * 0.1).astype(jnp.bfloat16),
        # torch.nn.init.normal_(classifier.weight): standard normal, [L, H]
        "cls_w": jax.random.normal(k_w, (L, H), dtype=jnp.float32),
        # torch.nn.init.zeros_(classifier.bias)
        "cls_b": jnp.zeros((L,), dtype=jnp.float32),
    }

    input_ids = jax.random.randint(k_ids, (B, S), 0, V, dtype=jnp.int32)
    labels = jax.random.randint(k_lbl, (B, S), 0, L, dtype=jnp.int32)
    attention_mask = jnp.ones((B, S), dtype=jnp.int32).at[:, S - 2:].set(0)

    fwd = jax.jit(protein_embed_forward)
    loss, probs = fwd(input_ids, attention_mask, labels, params)
    jax.block_until_ready((loss, probs))

    # lightweight sanity checks (pure-JAX reference at the same bf16 input /
    # f32 accumulation precision as the kernel)
    seq_out = params["embedding"][input_ids].reshape(-1, H)
    w_ref = params["cls_w"].T.astype(jnp.bfloat16)
    ref_logits = jnp.dot(seq_out, w_ref,
                         preferred_element_type=jnp.float32) + params["cls_b"]
    ref_probs = jax.nn.softmax(ref_logits, axis=-1).reshape(B, S, L)
    ref_lp = jax.nn.log_softmax(ref_logits, axis=-1)
    act = (attention_mask.reshape(-1) == 1)
    ref_nll = -jnp.take_along_axis(ref_lp, labels.reshape(-1, 1), axis=-1)[:, 0]
    ref_loss = jnp.sum(jnp.where(act, ref_nll, 0.0)) / jnp.sum(act)
    assert jnp.allclose(probs, ref_probs, atol=1e-4), "probs mismatch"
    assert jnp.allclose(loss, ref_loss, atol=1e-4), "loss mismatch"

    print("KERNEL_OK")
</pallas_src>

<mosaic_0001>
module attributes {stable_mosaic.version = 11 : i64} {
  func.func @kernel(%arg0: i32, %arg1: memref<16x32xbf16, #tpu.memory_space<vmem>>, %arg2: memref<32x128xbf16, #tpu.memory_space<vmem>>, %arg3: memref<1x128xf32, #tpu.memory_space<vmem>>, %arg4: memref<16x1xi32, #tpu.memory_space<vmem>>, %arg5: memref<16x2xf32, #tpu.memory_space<vmem>>, %arg6: memref<16x1xf32, #tpu.memory_space<vmem>>) attributes {dimension_semantics = [#tpu.dimension_semantics<parallel>], iteration_bounds = array<i64: 1>, scalar_prefetch = 0 : i64, scratch_operands = 0 : i64, tpu.core_type = #tpu.core_type<tc>, window_params = [{transform_indices = @transform_0, window_bounds = array<i64: 16, 32>}, {pipeline_mode = #tpu.pipeline_mode<synchronous>, transform_indices = @transform_1, window_bounds = array<i64: 32, 128>}, {pipeline_mode = #tpu.pipeline_mode<synchronous>, transform_indices = @transform_2, window_bounds = array<i64: 1, 128>}, {transform_indices = @transform_3, window_bounds = array<i64: 16, 1>}, {transform_indices = @transform_4, window_bounds = array<i64: 16, 2>}, {transform_indices = @transform_5, window_bounds = array<i64: 16, 1>}]} {
    %c0 = arith.constant 0 : index
    %c0_0 = arith.constant 0 : index
    %0 = vector.load %arg1[%c0, %c0_0] : memref<16x32xbf16, #tpu.memory_space<vmem>>, vector<16x32xbf16>
    %c0_1 = arith.constant 0 : index
    %c0_2 = arith.constant 0 : index
    %1 = vector.load %arg2[%c0_1, %c0_2] : memref<32x128xbf16, #tpu.memory_space<vmem>>, vector<32x128xbf16>
    %cst = arith.constant dense<0.000000e+00> : vector<16x128xf32>
    %2 = tpu.matmul %0, %1, %cst {dimension_numbers = #tpu.dot_dimension_numbers<[1], [0], [0], [1], [0, 0, 1, 1], [], []>} : vector<16x32xbf16>, vector<32x128xbf16>, vector<16x128xf32> -> vector<16x128xf32>
    %c0_3 = arith.constant 0 : index
    %c0_4 = arith.constant 0 : index
    %3 = vector.load %arg3[%c0_3, %c0_4] : memref<1x128xf32, #tpu.memory_space<vmem>>, vector<1x128xf32>
    %4 = vector.broadcast %3 : vector<1x128xf32> to vector<16x128xf32>
    %5 = arith.addf %2, %4 : vector<16x128xf32>
    %cst_5 = arith.constant dense<0xFF800000> : vector<16xf32>
    %6 = vector.multi_reduction <maximumf>, %5, %cst_5 [1] : vector<16x128xf32> to vector<16xf32>
    %7 = vector.shape_cast %6 : vector<16xf32> to vector<16x1xf32>
    %8 = vector.broadcast %7 : vector<16x1xf32> to vector<16x128xf32>
    %9 = arith.subf %5, %8 : vector<16x128xf32>
    %10 = math.exp %9 : vector<16x128xf32>
    %cst_6 = arith.constant dense<0.000000e+00> : vector<16xf32>
    %11 = vector.multi_reduction <add>, %10, %cst_6 [1] : vector<16x128xf32> to vector<16xf32>
    %12 = vector.shape_cast %11 : vector<16xf32> to vector<16x1xf32>
    %13 = tpu.reciprocal %12 : vector<16x1xf32> -> vector<16x1xf32>
    %14 = vector.broadcast %13 : vector<16x1xf32> to vector<16x128xf32>
    %15 = arith.mulf %10, %14 : vector<16x128xf32>
    %16 = vector.extract_strided_slice %15 {offsets = [0, 0], sizes = [16, 2], strides = [1, 1]} : vector<16x128xf32> to vector<16x2xf32>
    %c0_7 = arith.constant 0 : index
    %c0_8 = arith.constant 0 : index
    %17 = vector.load %arg5[%c0_7, %c0_8] : memref<16x2xf32, #tpu.memory_space<vmem>>, vector<16x2xf32>
    tpu.vector_store %arg5[%c0_7, %c0_8], %16 {strides = array<i32>} : memref<16x2xf32, #tpu.memory_space<vmem>>, vector<16x2xf32>,
    %18 = math.log %12 : vector<16x1xf32>
    %19 = arith.addf %7, %18 : vector<16x1xf32>
    %c0_9 = arith.constant 0 : index
    %c0_10 = arith.constant 0 : index
    %20 = vector.load %arg4[%c0_9, %c0_10] : memref<16x1xi32, #tpu.memory_space<vmem>>, vector<16x1xi32>
    %21 = tpu.iota {dimensions = array<i32: 1>} : vector<16x128xi32>
    %22 = vector.broadcast %20 : vector<16x1xi32> to vector<16x128xi32>
    %23 = arith.cmpi eq, %21, %22 : vector<16x128xi32>
    %24 = arith.extui %23 : vector<16x128xi1> to vector<16x128xi32>
    %25 = arith.sitofp %24 : vector<16x128xi32> to vector<16x128xf32>
    %26 = arith.mulf %25, %5 : vector<16x128xf32>
    %cst_11 = arith.constant dense<0.000000e+00> : vector<16xf32>
    %27 = vector.multi_reduction <add>, %26, %cst_11 [1] : vector<16x128xf32> to vector<16xf32>
    %28 = vector.shape_cast %27 : vector<16xf32> to vector<16x1xf32>
    %29 = arith.subf %19, %28 : vector<16x1xf32>
    %c0_i32 = arith.constant 0 : i32
    %30 = vector.broadcast %c0_i32 : i32 to vector<16x1xi32>
    %31 = arith.cmpi sge, %20, %30 : vector<16x1xi32>
    %cst_12 = arith.constant 0.000000e+00 : f32
    %32 = vector.broadcast %cst_12 : f32 to vector<16x1xf32>
    %33 = arith.select %31, %29, %32 : vector<16x1xi1>, vector<16x1xf32>
    %c0_13 = arith.constant 0 : index
    %c0_14 = arith.constant 0 : index
    %34 = vector.load %arg6[%c0_13, %c0_14] : memref<16x1xf32, #tpu.memory_space<vmem>>, vector<16x1xf32>
    tpu.vector_store %arg6[%c0_13, %c0_14], %33 {strides = array<i32>} : memref<16x1xf32, #tpu.memory_space<vmem>>, vector<16x1xf32>,
    return
  }
  func.func @transform_0(%arg0: i32) -> (i32, i32) {
    %c0_i32 = arith.constant 0 : i32
    %c0_i32_0 = arith.constant 0 : i32
    return %arg0, %c0_i32 : i32, i32
  }
  func.func @transform_1(%arg0: i32) -> (i32, i32) {
    %c0_i32 = arith.constant 0 : i32
    %c0_i32_0 = arith.constant 0 : i32
    %c0_i32_1 = arith.constant 0 : i32
    return %c0_i32, %c0_i32_0 : i32, i32
  }
  func.func @transform_2(%arg0: i32) -> (i32, i32) {
    %c0_i32 = arith.constant 0 : i32
    %c0_i32_0 = arith.constant 0 : i32
    %c0_i32_1 = arith.constant 0 : i32
    return %c0_i32, %c0_i32_0 : i32, i32
  }
  func.func @transform_3(%arg0: i32) -> (i32, i32) {
    %c0_i32 = arith.constant 0 : i32
    %c0_i32_0 = arith.constant 0 : i32
    return %arg0, %c0_i32 : i32, i32
  }
  func.func @transform_4(%arg0: i32) -> (i32, i32) {
    %c0_i32 = arith.constant 0 : i32
    %c0_i32_0 = arith.constant 0 : i32
    return %arg0, %c0_i32 : i32, i32
  }
  func.func @transform_5(%arg0: i32) -> (i32, i32) {
    %c0_i32 = arith.constant 0 : i32
    %c0_i32_0 = arith.constant 0 : i32
    return %arg0, %c0_i32 : i32, i32
  }
}

</mosaic_0001>

<llo_original>
// kernel: protein_embed_forward.1
$region0: #{protein_embed_forward.1}
  #allocation0 [shape = 'u32[]', space=smem, size = 0x4, offset = 0x4, fixed_abs, tag = 'smem constant byte address 0x4 - core index']
  #allocation1 [shape = 'u32[144,128]{1,0:T(1,128)}', space=vmem, size = 0x12000, scoped, tag = 'internal scratch']
  %s0 = inlined_call_operand.vmem [shape: bf16[16,32], index: 0, kind: input, shape index: {}]
  %s1 = inlined_call_operand.vmem [shape: bf16[32,128], index: 1, kind: input, shape index: {}]
  %s2 = inlined_call_operand.vmem [shape: f32[1,128], index: 2, kind: input, shape index: {}]
  %s3 = inlined_call_operand.vmem [shape: s32[16,1], index: 3, kind: input, shape index: {}]
  %s4 = inlined_call_operand.vmem [shape: f32[16,2], index: 4, kind: output, shape index: {0}]
  %s5 = inlined_call_operand.vmem [shape: f32[16,1], index: 5, kind: output, shape index: {1}]
  %6 = xla_tuple %s4, %s5
  %s7 = sld [smem:[#allocation0]]
  $region34: #{protein_embed_forward.1} parent=0
    _
  %s9 = ssub.s32 1, %s7
  %s10 = scalar_select 0, %s9, %s7
  // Predicated region
  $region2: #{protein_embed_forward.1} parent=0 // pred_check
    _
  $region3: #{protein_embed_forward.1} parent=0 // pred_check_branch
    %12 = sbr.rel (0) target = $region5
  $region4: #{protein_embed_forward.1} parent=0 // pred_region
    _
  $region5: #{protein_embed_forward.1} parent=0 // pred_fallthru
    _
  // Predicated region
  $region6: #{protein_embed_forward.1} parent=0 // pred_check
    _
  $region7: #{protein_embed_forward.1} parent=0 // pred_check_branch
    %14 = sbr.rel (0) target = $region9
  $region8: #{protein_embed_forward.1} parent=0 // pred_region
    _
  $region9: #{protein_embed_forward.1} parent=0 // pred_fallthru
    _
  // Predicated region
  $region10: #{protein_embed_forward.1} parent=0 // pred_check
    _
  $region11: #{protein_embed_forward.1} parent=0 // pred_check_branch
    %16 = sbr.rel (0) target = $region13
  $region12: #{protein_embed_forward.1} parent=0 // pred_region
    _
  $region13: #{protein_embed_forward.1} parent=0 // pred_fallthru
    _
  // Predicated region
  $region14: #{protein_embed_forward.1} parent=0 // pred_check
    _
  $region15: #{protein_embed_forward.1} parent=0 // pred_check_branch
    %18 = sbr.rel (0) target = $region17
  $region16: #{protein_embed_forward.1} parent=0 // pred_region
    _
  $region17: #{protein_embed_forward.1} parent=0 // pred_fallthru
    _
  %v20 = vld [vmem:[%s0] sm:$0xf]
  %v21 = vld [vmem:[%s0 + $0x4] sm:$0xf]
  %v22 = vld [vmem:[%s1] sm:$0xf]
  %v23 = vld [vmem:[%s1 + $0x4] sm:$0xf]
  %v24 = vld [vmem:[%s1 + $0x8] sm:$0xf]
  %v25 = vld [vmem:[%s1 + $0xc] sm:$0xf]
  %v26 = vld [vmem:[%s2] sm:$0x1]
  %v28 = vlaneseq
  %v29 = vshrl.u32 %v28, 7
  %v30 = vsub.s32 0, %v29
  %v31 = vrot.slane %v26, %v30
  %v35 = vunpack.c.l.b16 %v20
  %v36 = vunpack.c.l.b16 %v21
  %v37 = vpack.c.b16 %v36, %v35
  %v42 = vunpack.c.l.b16 %v22
  %v43 = vunpack.c.l.b16 %v23
  %v44 = vunpack.c.l.b16 %v24
  %v45 = vunpack.c.l.b16 %v25
  %v46 = vpack.c.b16 %v43, %v42
  %v47 = vpack.c.b16 %v45, %v44
  %vm50 = vcmask 261120
  %v52 = vsel %vm50, %v37, 0
  %54 = vmatprep.subr.bf16.mxu0 0
  %55 = vmatpush1.bf16.msra.mxu0 %v46
  %56 = vmatprep.subr.bf16.mxu0 0
  %57 = vmatpush1.bf16.msra.mxu0 %v47
  %58 = vmatprep.subr.bf16.mxu0 0
  %59 = vmatpush1.bf16.msra.mxu0 0
  %60 = vmatprep.subr.bf16.mxu0 0
  %61 = vmatpush1.bf16.msra.mxu0 0
  %62 = vmatprep.subr.bf16.mxu0 0
  %63 = vmatpush1.bf16.msra.mxu0 0
  %64 = vmatprep.subr.bf16.mxu0 0
  %65 = vmatpush1.bf16.msra.mxu0 0
  %66 = vmatprep.subr.bf16.mxu0 0
  %67 = vmatpush1.bf16.msra.mxu0 0
  %68 = vmatprep.subr.bf16.mxu0 0
  %69 = vmatpush1.bf16.msra.mxu0 0
  %70 = vmatprep.subr.bf16.mxu0 0
  %71 = vmatpush1.bf16.msra.mxu0 0
  %72 = vmatprep.subr.bf16.mxu0 0
  %73 = vmatpush1.bf16.msra.mxu0 0
  %74 = vmatprep.subr.bf16.mxu0 0
  %75 = vmatpush1.bf16.msra.mxu0 0
  %76 = vmatprep.subr.bf16.mxu0 0
  %77 = vmatpush1.bf16.msra.mxu0 0
  %78 = vmatprep.subr.bf16.mxu0 0
  %79 = vmatpush1.bf16.msra.mxu0 0
  %80 = vmatprep.subr.bf16.mxu0 0
  %81 = vmatpush1.bf16.msra.mxu0 0
  %82 = vmatprep.subr.bf16.mxu0 0
  %83 = vmatpush1.bf16.msra.mxu0 0
  %84 = vmatprep.subr.bf16.mxu0 0
  %85 = vmatpush1.bf16.msra.mxu0 0
  %86 = vmatprep.mubr.bf16.mxu0 0
  %87 = vmatmul.mubr.bf16.gmra.mrb[0].mxu0 %v52
  %v88 = vpop.f32.mrb[0].mxu0
  %v89 = vadd.f32 %v31, %v88
  %v90 = vpop.f32.mrb[0].mxu0
  %v91 = vpop.f32.mrb[0].mxu0
  %v92 = vadd.f32 %v31, %v91
  %v93 = vpop.f32.mrb[0].mxu0
  %94 = vdwg.mxu0
  %95 = vmax.xlane.f32.xlu0 %v89
  %v96 = vpop.xlane.xlu0 %95
  %97 = vmax.xlane.f32.xlu0 %v92
  %v98 = vpop.xlane.xlu0 %97
  %v99 = vsub.f32 %v89, %v96
  %v100 = vsub.f32 %v92, %v98
  %v101 = vmul.f32 %v99, 1.442695
  %v102 = vpow.pop %v101
  %v103 = vmul.f32 %v100, 1.442695
  %v104 = vpow.pop %v103
  %105 = vadd.xlane.f32.xlu0 %v102
  %v106 = vpop.xlane.xlu0 %105
  %107 = vadd.xlane.f32.xlu0 %v104
  %v108 = vpop.xlane.xlu0 %107
  %v109 = vrcp.pop %v106
  %v110 = vrcp.pop %v108
  %v111 = vmul.f32 %v102, %v109
  %v112 = vmul.f32 %v104, %v110
  %vm113 = vcmask 15360
  %114 = vst.msk [vmem:[%s4] sm:$0xff] %vm113, %v111
  %115 = vst.msk [vmem:[%s4 + $0x8] sm:$0xff] %vm113, %v112
  %v116 = vlog2.pop %v106
  %v117 = vmul.f32 %v116, 0.6931472
  %v118 = vlog2.pop %v108
  %v119 = vmul.f32 %v118, 0.6931472
  %v120 = vadd.f32 %v96, %v117
  %v121 = vadd.f32 %v98, %v119
  %v122 = vld [vmem:[%s3] sm:$0xff]
  %v123 = vld [vmem:[%s3 + $0x8] sm:$0xff]
  %v124 = vlaneseq
  %v125 = vand.u32 %v124, 127
  %126 = vset.pattern.permute.xlu0 0
  %127 = vperm.xlu0 %126, %v122
  %v128 = vpop.permute.xlu0 %127
  %129 = vset.pattern.permute.xlu0 0
  %130 = vperm.xlu0 %129, %v123
  %v131 = vpop.permute.xlu0 %130
  %vm132 = vcmp.eq.s32.totalorder %v125, %v128
  %vm133 = vcmp.eq.s32.totalorder %v125, %v131
  %v134 = vsel %vm132, 1, 0
  %v135 = vsel %vm133, 1, 0
  %v136 = vcvt.s32.f32 %v134
  %v137 = vcvt.s32.f32 %v135
  %v138 = vmul.f32 %v136, %v89
  %v139 = vmul.f32 %v137, %v92
  %140 = vadd.xlane.f32.xlu0 %v138
  %v141 = vpop.xlane.xlu0 %140
  %142 = vadd.xlane.f32.xlu0 %v139
  %v143 = vpop.xlane.xlu0 %142
  %v144 = vsub.f32 %v120, %v141
  %v145 = vsub.f32 %v121, %v143
  %vm146 = vcmp.ge.s32.totalorder %v122, 0
  %vm147 = vcmp.ge.s32.totalorder %v123, 0
  %v148 = vsel %vm146, %v144, 0.0
  %v149 = vsel %vm147, %v145, 0.0
  %vm150 = vcmask 7168
  %151 = vst.msk [vmem:[%s5] sm:$0xff] %vm150, %v148
  %152 = vst.msk [vmem:[%s5 + $0x8] sm:$0xff] %vm150, %v149
  // Predicated region
  $region18: #{protein_embed_forward.1} parent=0 // pred_check
    _
  $region19: #{protein_embed_forward.1} parent=0 // pred_check_branch
    %154 = sbr.rel (0) target = $region21
  $region20: #{protein_embed_forward.1} parent=0 // pred_region
    _
  $region21: #{protein_embed_forward.1} parent=0 // pred_fallthru
    _
  // Predicated region
  $region22: #{protein_embed_forward.1} parent=0 // pred_check
    _
  $region23: #{protein_embed_forward.1} parent=0 // pred_check_branch
    %156 = sbr.rel (0) target = $region25
  $region24: #{protein_embed_forward.1} parent=0 // pred_region
    _
  $region25: #{protein_embed_forward.1} parent=0 // pred_fallthru
    _
  // Predicated region
  $region26: #{protein_embed_forward.1} parent=0 // pred_check
    _
  $region27: #{protein_embed_forward.1} parent=0 // pred_check_branch
    %158 = sbr.rel (0) target = $region29
  $region28: #{protein_embed_forward.1} parent=0 // pred_region
    _
  $region29: #{protein_embed_forward.1} parent=0 // pred_fallthru
    _
  // Predicated region
  $region30: #{protein_embed_forward.1} parent=0 // pred_check
    _
  $region31: #{protein_embed_forward.1} parent=0 // pred_check_branch
    %160 = sbr.rel (0) target = $region33
  $region32: #{protein_embed_forward.1} parent=0 // pred_region
    _
  $region33: #{protein_embed_forward.1} parent=0 // pred_fallthru
    _

</llo_original>
